<compile_context>
chip_gen: v6e
topology: v6e:2x2x1
jax: 0.10.0
libtpu: 0.0.40
codegen_flags: <defaults>
</compile_context>

<pallas_src>
import math

import jax
import jax.numpy as jnp
from jax import lax
from jax.experimental import pallas as pl
from jax.experimental.pallas import tpu as pltpu

EPS = 1e-5


def subnet_kernel(x_ref, w_ref, p_ref, o_ref):
    # x_ref: (TR, P*D_in)   w_ref: (P*D_in, P*H)   p_ref: (3, P*H) = [bias; bn_scale; bn_shift]
    # o_ref: (TR, P*H)      (P = lane packing factor so P*D_in and P*H are multiples of 128)
    h = jnp.dot(x_ref[...], w_ref[...], preferred_element_type=jnp.float32)
    h = h + p_ref[0:1, :]                       # Linear bias (broadcast over rows)
    h = jnp.maximum(h, 0.0)                     # ReLU
    y = h * p_ref[1:2, :] + p_ref[2:3, :]       # eval-mode BatchNorm folded to scale/shift
    o_ref[...] = y.astype(o_ref.dtype)          # Dropout (eval) == identity


def _pack_factor(d_in, h, max_pack=8):
    """Smallest pack so pack*d_in and pack*h are multiples of 128 (input AND output lane-dense)."""
    def need(n):
        return 128 // math.gcd(n, 128)
    p_out, p_in = need(h), need(d_in)
    p_full = p_out * p_in // math.gcd(p_out, p_in)     # lcm
    if p_full <= max_pack:
        return p_full
    if p_out <= max_pack:
        return p_out        # output lane-dense only; input stays ragged
    return 1                # fallback: masked (vst.msk) stores — correct but slower


def _choose_super_tile(n_super, pack, d_in, h, in_item, out_item,
                       vmem_budget_bytes, min_grid_steps):
    """Rows-per-grid-step (in packed super-rows) from a double-buffered VMEM byte budget."""
    per_row = 2 * pack * (d_in * in_item + h * out_item)            # x + out, double-buffered
    fixed = 2 * (pack * d_in * pack * h * in_item) + 2 * (3 * pack * h * 4)  # weight + params
    st = max((vmem_budget_bytes - fixed) // per_row, 16)
    if n_super > 16:
        # keep >= min_grid_steps grid steps so the "parallel" axis can feed both v7x TCs
        st = min(st, -(-n_super // min_grid_steps))
    return int(max(16, (st // 16) * 16))                             # multiple of 16 (bf16-safe)


def subnetwork_timeseries_forward(x, w_t, b, gamma, beta, running_mean, running_var,
                                  *, out_dtype=None,
                                  vmem_budget_bytes=24 << 20,
                                  vmem_limit_bytes=32 << 20,
                                  min_grid_steps=2,
                                  max_pack=8):
    """x: (B, D_in) in the desired compute dtype (f32 or bf16); w_t: (D_in, H) = torch weight.T."""
    B, D_in = x.shape
    H = w_t.shape[1]
    compute_dtype = x.dtype          # no wrapper cast: pass x already in the compute dtype
    if out_dtype is None:
        out_dtype = x.dtype

    # ---- fold eval-mode BatchNorm into scale/shift, stack all per-feature params (f32) ----
    scale = (gamma.astype(jnp.float32) * lax.rsqrt(running_var.astype(jnp.float32) + EPS))
    shift = beta.astype(jnp.float32) - running_mean.astype(jnp.float32) * scale
    params = jnp.stack([b.astype(jnp.float32), scale, shift])                    # (3, H)

    # ---- lane packing so both input and output lane dims are dense multiples of 128 ----
    pack = _pack_factor(D_in, H, max_pack)
    params = jnp.tile(params, (1, pack))                                         # (3, P*H)
    # block-diagonal weight: packed row r = [x_{P*r}, ..., x_{P*r+P-1}] concatenated
    w_blk = jnp.kron(jnp.eye(pack, dtype=jnp.float32),
                     w_t.astype(jnp.float32)).astype(compute_dtype)              # (P*D_in, P*H)

    # ---- batch tiling (in packed super-rows), VMEM-budget driven ----
    in_item = jnp.dtype(compute_dtype).itemsize
    out_item = jnp.dtype(out_dtype).itemsize
    n_super = -(-B // pack)
    super_tile = _choose_super_tile(n_super, pack, D_in, H, in_item, out_item,
                                    vmem_budget_bytes, min_grid_steps)
    n_super_pad = -(-n_super // super_tile) * super_tile
    b_pad = n_super_pad * pack

    # pad only when needed (b_pad == B -> zero extra HBM passes); reshape is a free row-major view
    x_p = x if b_pad == B else jnp.pad(x, ((0, b_pad - B), (0, 0)))
    x_p = x_p.reshape(n_super_pad, pack * D_in)

    grid = (n_super_pad // super_tile,)
    flops = 2 * n_super_pad * (pack * D_in) * (pack * H)
    bytes_accessed = (x_p.size * in_item + n_super_pad * pack * H * out_item
                      + w_blk.size * in_item + params.size * 4)

    out = pl.pallas_call(
        subnet_kernel,
        out_shape=jax.ShapeDtypeStruct((n_super_pad, pack * H), out_dtype),
        grid_spec=pltpu.PrefetchScalarGridSpec(
            num_scalar_prefetch=0,
            grid=grid,
            in_specs=[
                pl.BlockSpec((super_tile, pack * D_in), lambda i: (i, 0)),   # x tile (lane-dense)
                pl.BlockSpec((pack * D_in, pack * H), lambda i: (0, 0)),     # weight (resident)
                pl.BlockSpec((3, pack * H), lambda i: (0, 0)),               # [bias; scale; shift]
            ],
            out_specs=pl.BlockSpec((super_tile, pack * H), lambda i: (i, 0)),
        ),
        compiler_params=pltpu.CompilerParams(
            dimension_semantics=("parallel",),
            vmem_limit_bytes=vmem_limit_bytes),
        cost_estimate=pl.CostEstimate(flops=flops, transcendentals=0,
                                      bytes_accessed=bytes_accessed),
    )(x_p, w_blk, params)

    # unpack lanes back to (B, H): free row-major reshape (+ slice only if we padded)
    out = out.reshape(b_pad, H)
    return out if b_pad == B else out[:B]


def reference_forward(x, w_t, b, gamma, beta, running_mean, running_var):
    h = jnp.maximum(x @ w_t + b, 0.0)
    return (h - running_mean) * lax.rsqrt(running_var + EPS) * gamma + beta


if __name__ == "__main__":
    # small shapes consistent with the module's forward: (batch, input_size_timeseries)
    B = 100                       # deliberately not a tile multiple -> exercises padding path
    input_size_timeseries = 32
    hidden_size_timeseries = 64

    key = jax.random.PRNGKey(0)
    kx, kw, kb, kg, kbeta, km, kv = jax.random.split(key, 7)

    x = jax.random.normal(kx, (B, input_size_timeseries), dtype=jnp.float32)

    # torch Linear weight is (H, D_in); store transposed as (D_in, H)
    w_torch = jax.random.normal(kw, (hidden_size_timeseries, input_size_timeseries),
                                dtype=jnp.float32) * 0.1
    w_t = w_torch.T
    b = jax.random.normal(kb, (hidden_size_timeseries,), jnp.float32) * 0.1
    gamma = 1.0 + 0.1 * jax.random.normal(kg, (hidden_size_timeseries,), jnp.float32)
    beta = 0.1 * jax.random.normal(kbeta, (hidden_size_timeseries,), jnp.float32)
    running_mean = 0.1 * jax.random.normal(km, (hidden_size_timeseries,), jnp.float32)
    running_var = jnp.abs(1.0 + 0.1 * jax.random.normal(kv, (hidden_size_timeseries,),
                                                        jnp.float32))

    ref = reference_forward(x, w_t, b, gamma, beta, running_mean, running_var)

    # f32 path (multi-step "parallel" grid even at this tiny batch thanks to min_grid_steps=2)
    out = subnetwork_timeseries_forward(x, w_t, b, gamma, beta, running_mean, running_var)
    out = jax.block_until_ready(out)
    assert out.shape == (B, hidden_size_timeseries)
    assert jnp.allclose(out, ref, atol=1e-5, rtol=1e-5), "f32 mismatch vs pure-JAX reference"

    # bf16 input/weight + bf16 output path (f32 MXU accumulation + f32 epilogue); works on
    # v5e/v6e/v7x and cuts HBM read AND write traffic roughly in half.
    x_bf16 = x.astype(jnp.bfloat16)   # cast belongs in the producer; done here only for the demo
    out_bf16 = subnetwork_timeseries_forward(x_bf16, w_t, b, gamma, beta,
                                             running_mean, running_var,
                                             out_dtype=jnp.bfloat16)
    out_bf16 = jax.block_until_ready(out_bf16)
    assert out_bf16.shape == (B, hidden_size_timeseries)
    assert out_bf16.dtype == jnp.bfloat16
    assert jnp.allclose(out_bf16.astype(jnp.float32), ref, atol=1e-1, rtol=1e-1), \
        "bf16 mismatch vs reference"

    print("KERNEL_OK")
</pallas_src>

<mosaic_0001>
module attributes {stable_mosaic.version = 11 : i64} {
  func.func @subnet_kernel(%arg0: i32, %arg1: memref<16x128xf32, #tpu.memory_space<vmem>>, %arg2: memref<128x256xf32, #tpu.memory_space<vmem>>, %arg3: memref<3x256xf32, #tpu.memory_space<vmem>>, %arg4: memref<16x256xf32, #tpu.memory_space<vmem>>) attributes {dimension_semantics = [#tpu.dimension_semantics<parallel>], iteration_bounds = array<i64: 2>, scalar_prefetch = 0 : i64, scratch_operands = 0 : i64, tpu.core_type = #tpu.core_type<tc>, window_params = [{transform_indices = @transform_0, window_bounds = array<i64: 16, 128>}, {pipeline_mode = #tpu.pipeline_mode<synchronous>, transform_indices = @transform_1, window_bounds = array<i64: 128, 256>}, {pipeline_mode = #tpu.pipeline_mode<synchronous>, transform_indices = @transform_2, window_bounds = array<i64: 3, 256>}, {transform_indices = @transform_3, window_bounds = array<i64: 16, 256>}]} {
    %c0 = arith.constant 0 : index
    %c0_0 = arith.constant 0 : index
    %0 = vector.load %arg1[%c0, %c0_0] : memref<16x128xf32, #tpu.memory_space<vmem>>, vector<16x128xf32>
    %c0_1 = arith.constant 0 : index
    %c0_2 = arith.constant 0 : index
    %1 = vector.load %arg2[%c0_1, %c0_2] : memref<128x256xf32, #tpu.memory_space<vmem>>, vector<128x256xf32>
    %cst = arith.constant dense<0.000000e+00> : vector<16x256xf32>
    %2 = tpu.matmul %0, %1, %cst {dimension_numbers = #tpu.dot_dimension_numbers<[1], [0], [0], [1], [0, 0, 1, 1], [], []>} : vector<16x128xf32>, vector<128x256xf32>, vector<16x256xf32> -> vector<16x256xf32>
    %c0_3 = arith.constant 0 : index
    %c0_4 = arith.constant 0 : index
    %3 = vector.load %arg3[%c0_3, %c0_4] : memref<3x256xf32, #tpu.memory_space<vmem>>, vector<1x256xf32>
    %4 = vector.broadcast %3 : vector<1x256xf32> to vector<16x256xf32>
    %5 = arith.addf %2, %4 : vector<16x256xf32>
    %cst_5 = arith.constant 0.000000e+00 : f32
    %6 = vector.broadcast %cst_5 : f32 to vector<16x256xf32>
    %7 = arith.maximumf %5, %6 : vector<16x256xf32>
    %c1 = arith.constant 1 : index
    %c0_6 = arith.constant 0 : index
    %8 = vector.load %arg3[%c1, %c0_6] : memref<3x256xf32, #tpu.memory_space<vmem>>, vector<1x256xf32>
    %9 = vector.broadcast %8 : vector<1x256xf32> to vector<16x256xf32>
    %10 = arith.mulf %7, %9 : vector<16x256xf32>
    %c2 = arith.constant 2 : index
    %c0_7 = arith.constant 0 : index
    %11 = vector.load %arg3[%c2, %c0_7] : memref<3x256xf32, #tpu.memory_space<vmem>>, vector<1x256xf32>
    %12 = vector.broadcast %11 : vector<1x256xf32> to vector<16x256xf32>
    %13 = arith.addf %10, %12 : vector<16x256xf32>
    %c0_8 = arith.constant 0 : index
    %c0_9 = arith.constant 0 : index
    %14 = vector.load %arg4[%c0_8, %c0_9] : memref<16x256xf32, #tpu.memory_space<vmem>>, vector<16x256xf32>
    tpu.vector_store %arg4[%c0_8, %c0_9], %13 {strides = array<i32>} : memref<16x256xf32, #tpu.memory_space<vmem>>, vector<16x256xf32>,
    return
  }
  func.func @transform_0(%arg0: i32) -> (i32, i32) {
    %c0_i32 = arith.constant 0 : i32
    %c0_i32_0 = arith.constant 0 : i32
    return %arg0, %c0_i32 : i32, i32
  }
  func.func @transform_1(%arg0: i32) -> (i32, i32) {
    %c0_i32 = arith.constant 0 : i32
    %c0_i32_0 = arith.constant 0 : i32
    %c0_i32_1 = arith.constant 0 : i32
    return %c0_i32, %c0_i32_0 : i32, i32
  }
  func.func @transform_2(%arg0: i32) -> (i32, i32) {
    %c0_i32 = arith.constant 0 : i32
    %c0_i32_0 = arith.constant 0 : i32
    %c0_i32_1 = arith.constant 0 : i32
    return %c0_i32, %c0_i32_0 : i32, i32
  }
  func.func @transform_3(%arg0: i32) -> (i32, i32) {
    %c0_i32 = arith.constant 0 : i32
    %c0_i32_0 = arith.constant 0 : i32
    return %arg0, %c0_i32 : i32, i32
  }
}

</mosaic_0001>

<llo_original>
// kernel: tpu_custom_call.1
$region0: #{tpu_custom_call.1}
  #allocation0 [shape = 'u32[]', space=smem, size = 0x4, offset = 0x4, fixed_abs, tag = 'smem constant byte address 0x4 - core index']
  #allocation1 [shape = 'u32[144,128]{1,0:T(1,128)}', space=vmem, size = 0x12000, scoped, tag = 'internal scratch']
  %s0 = inlined_call_operand.hbm [shape: f32[32,128], index: 0, kind: input, shape index: {}]
  %s1 = inlined_call_operand.hbm [shape: f32[128,256], index: 1, kind: input, shape index: {}]
  %s2 = inlined_call_operand.hbm [shape: f32[3,256], index: 2, kind: input, shape index: {}]
  %s3 = inlined_call_operand.hbm [shape: f32[32,256], index: 3, kind: output, shape index: {}]
  %s4 = sld [smem:[#allocation0]]
  $region57: #{tpu_custom_call.1} parent=0
    _
  %s6 = ssub.s32 1, %s4
  %s7 = scalar_select 0, %s6, %s4
  $region1: #{tpu_custom_call.1} parent=0
    #allocation2 [shape = 'u8[16384]{0}', space=vmem, size = 0x4000, scoped, tag = 'input window, operand 0']
    #allocation3 [shape = 's32[2]{0}', space=sflag, size = 0x8, scoped, tag = 'scoped memory for tpu_custom_call.1']
    #allocation4 [shape = 's32[2]{0}', space=sflag, size = 0x8, scoped, tag = 'scoped memory for tpu_custom_call.1']
    #allocation5 [shape = 'u8[131072]{0}', space=vmem, size = 0x20000, scoped, tag = 'input window, operand 1, single buffered']
    #allocation6 [shape = 's32[1]{0}', space=sflag, size = 0x4, scoped, tag = 'scoped memory for tpu_custom_call.1']
    #allocation7 [shape = 'u8[4096]{0}', space=vmem, size = 0x1000, scoped, tag = 'input window, operand 2, single buffered']
    #allocation8 [shape = 'u8[32768]{0}', space=vmem, size = 0x8000, scoped, tag = 'output window, operand 0']
    %8 = vsyncpa [#allocation3], 0
    %s9 = scalar_lea.sflag [#allocation3], 1
    %10 = vsyncpa %s9, 0
    %11 = vsyncpa [#allocation6], 0
    %12 = vsyncpa [#allocation4], 0
    %s13 = scalar_lea.sflag [#allocation4], 1
    %14 = vsyncpa %s13, 0
    loop: start=0, step=1, limit=4
    $region2: #{tpu_custom_call.1} parent=1 // loop_pre_header
      _
    $region3: #{tpu_custom_call.1} parent=1 // loop_header
      %s16 = sphi 0, %s20
      %p17 = scmp.ge.s32.totalorder %s16, 4
      %s26 = sphi 0, %s28
      %s29 = sphi 0, %s26
      %s30 = sphi 0, %s29
      %s46 = sphi 0, %s30
      %s50 = sphi 0, %s50
      %s52 = sphi 0, %s50
      %s53 = sphi 0, %s52
      %s67 = sphi 0, %s53
      %s71 = sphi 0, %s71
      %s73 = sphi 0, %s71
      %s74 = sphi 0, %s73
      %s88 = sphi 0, %s74
      %s94 = sphi 0, %s96
      %s97 = sphi 0, %s94
      %s98 = sphi 0, %s97
      %s114 = sphi 0, %s98
    $region4: #{tpu_custom_call.1} parent=1 // loop_header_branch
      %19 = sbr.rel (%p17) target = $region8
    $region5: #{tpu_custom_call.1} parent=1 // loop_body
      %s21 = ssub.s32 %s16, 1
      %s22 = ssub.s32 %s16, 2
      %s23 = sadd.s32 %s16, 1
      %s24 = ssub.s32 %s16, %s23
      %p25 = scmp.eq.s32.totalorder %s24, 0
      %s27 = sadd.s32 %s26, 1
      %s28 = scalar_select %p25, %s26, %s27
      %p31 = pneg %p25
      %p32 = scmp.eq.s32.totalorder %s16, 1
      %p33 = por %p31, %p32
      %p34 = scmp.ne.s32.totalorder %s26, %s29
      %p35 = scmp.eq.s32.totalorder %s16, 0
      %p36 = por %p34, %p35
      %p37 = scmp.ne.s32.totalorder %s26, %s29
      %p38 = scmp.eq.s32.totalorder %s21, 1
      %p39 = por %p37, %p38
      %p40 = scmp.ne.s32.totalorder %s29, %s30
      %p41 = scmp.eq.s32.totalorder %s21, 0
      %p42 = por %p40, %p41
      %p43 = scmp.ne.s32.totalorder %s29, %s30
      %p44 = scmp.eq.s32.totalorder %s22, 1
      %p45 = por %p43, %p44
      %p47 = scmp.ne.s32.totalorder %s30, %s46
      %p48 = scmp.eq.s32.totalorder %s22, 0
      %p49 = por %p47, %p48
      %s51 = sadd.s32 %s50, 1
      %p54 = scmp.eq.s32.totalorder %s16, 1
      %p55 = scmp.ne.s32.totalorder %s50, %s52
      %p56 = scmp.eq.s32.totalorder %s16, 0
      %p57 = por %p55, %p56
      %p58 = scmp.ne.s32.totalorder %s50, %s52
      %p59 = scmp.eq.s32.totalorder %s21, 1
      %p60 = por %p58, %p59
      %p61 = scmp.ne.s32.totalorder %s52, %s53
      %p62 = scmp.eq.s32.totalorder %s21, 0
      %p63 = por %p61, %p62
      %p64 = scmp.ne.s32.totalorder %s52, %s53
      %p65 = scmp.eq.s32.totalorder %s22, 1
      %p66 = por %p64, %p65
      %p68 = scmp.ne.s32.totalorder %s53, %s67
      %p69 = scmp.eq.s32.totalorder %s22, 0
      %p70 = por %p68, %p69
      %s72 = sadd.s32 %s71, 1
      %p75 = scmp.eq.s32.totalorder %s16, 1
      %p76 = scmp.ne.s32.totalorder %s71, %s73
      %p77 = scmp.eq.s32.totalorder %s16, 0
      %p78 = por %p76, %p77
      %p79 = scmp.ne.s32.totalorder %s71, %s73
      %p80 = scmp.eq.s32.totalorder %s21, 1
      %p81 = por %p79, %p80
      %p82 = scmp.ne.s32.totalorder %s73, %s74
      %p83 = scmp.eq.s32.totalorder %s21, 0
      %p84 = por %p82, %p83
      %p85 = scmp.ne.s32.totalorder %s73, %s74
      %p86 = scmp.eq.s32.totalorder %s22, 1
      %p87 = por %p85, %p86
      %p89 = scmp.ne.s32.totalorder %s74, %s88
      %p90 = scmp.eq.s32.totalorder %s22, 0
      %p91 = por %p89, %p90
      %s92 = ssub.s32 %s16, %s23
      %p93 = scmp.eq.s32.totalorder %s92, 0
      %s95 = sadd.s32 %s94, 1
      %s96 = scalar_select %p93, %s94, %s95
      %p99 = pneg %p93
      %p100 = scmp.eq.s32.totalorder %s16, 1
      %p101 = por %p99, %p100
      %p102 = scmp.ne.s32.totalorder %s94, %s97
      %p103 = scmp.eq.s32.totalorder %s16, 0
      %p104 = por %p102, %p103
      %p105 = scmp.ne.s32.totalorder %s94, %s97
      %p106 = scmp.eq.s32.totalorder %s21, 1
      %p107 = por %p105, %p106
      %p108 = scmp.ne.s32.totalorder %s97, %s98
      %p109 = scmp.eq.s32.totalorder %s21, 0
      %p110 = por %p108, %p109
      %p111 = scmp.ne.s32.totalorder %s97, %s98
      %p112 = scmp.eq.s32.totalorder %s22, 1
      %p113 = por %p111, %p112
      %p115 = scmp.ne.s32.totalorder %s98, %s114
      %p116 = scmp.eq.s32.totalorder %s22, 0
      %p117 = por %p115, %p116
      %p118 = scmp.le.s32.totalorder 1, %s16
      %p119 = scmp.lt.s32.totalorder %s16, 3
      %p120 = pnand %p118, %p119
      %p121 = pneg %p120
      // Predicated region
      $region9: #{tpu_custom_call.1} parent=5 // pred_check
        _
      $region10: #{tpu_custom_call.1} parent=5 // pred_check_branch
        %123 = sbr.rel (%p120) target = $region12
      $region11: #{tpu_custom_call.1} parent=5 // pred_region
        %s124 = ssub.s32 %s16, 1
        // Predicated region
        $region13: #{tpu_custom_call.1} parent=11 // pred_check
          %p125 = pneg %p63
        $region14: #{tpu_custom_call.1} parent=11 // pred_check_branch
          %127 = sbr.rel (%p125) target = $region16
        $region15: #{tpu_custom_call.1} parent=11 // pred_region
          %s129 = ssub.s32 4096, 4096
          %130 = vsyncadd [#allocation6], %s129
          %s131 = sshll.u32 [#allocation5], 4
          %s132 = int_to_ptr.vmem [resolvable:$true] %s131
          %137 = dma.hbm_to_vmem [thread:$0]  %s1, 4096, %s132, [#allocation6], 256, 256, 16
        $region16: #{tpu_custom_call.1} parent=11 // pred_fallthru
          _
        // Predicated region
        $region17: #{tpu_custom_call.1} parent=11 // pred_check
          %p138 = pneg %p84
        $region18: #{tpu_custom_call.1} parent=11 // pred_check_branch
          %140 = sbr.rel (%p138) target = $region20
        $region19: #{tpu_custom_call.1} parent=11 // pred_region
          %s142 = ssub.s32 128, 128
          %143 = vsyncadd [#allocation6], %s142
          %s145 = sshll.u32 [#allocation7], 4
          %s146 = int_to_ptr.vmem [resolvable:$true] %s145
          %148 = dma.hbm_to_vmem [thread:$0]  %s2, 128, %s146, [#allocation6]
        $region20: #{tpu_custom_call.1} parent=11 // pred_fallthru
          _
      $region12: #{tpu_custom_call.1} parent=5 // pred_fallthru
        _
      %p149 = scmp.lt.s32.totalorder %s16, 2
      // Predicated region
      $region21: #{tpu_custom_call.1} parent=5 // pred_check
        %p150 = pneg %p149
      $region22: #{tpu_custom_call.1} parent=5 // pred_check_branch
        %152 = sbr.rel (%p150) target = $region24
      $region23: #{tpu_custom_call.1} parent=5 // pred_region
        // Predicated region
        $region25: #{tpu_custom_call.1} parent=23 // pred_check
          %p153 = pneg %p36
        $region26: #{tpu_custom_call.1} parent=23 // pred_check_branch
          %155 = sbr.rel (%p153) target = $region28
        $region27: #{tpu_custom_call.1} parent=23 // pred_region
          %s156 = sand.u32 %s26, 1
          %s157 = scalar_lea.sflag [#allocation3], %s156
          %s158 = sand.u32 %s26, 1
          %s159 = smul.addr %s158, 16
          %s160 = scalar_lea.vmem [#allocation2], %s159
          %s161 = smul.u32 2, %s16
          %s163 = ssub.s32 256, 256
          %164 = vsyncadd %s157, %s163
          %s165 = smul.addr %s161, 128
          %s166 = scalar_lea.hbm %s0, %s165
          %s167 = sshll.u32 %s160, 4
          %s168 = int_to_ptr.vmem [resolvable:$true] %s167
          %173 = dma.hbm_to_vmem [thread:$0]  %s166, 256, %s168, %s157, 128, 128, 8
        $region28: #{tpu_custom_call.1} parent=23 // pred_fallthru
          _
      $region24: #{tpu_custom_call.1} parent=5 // pred_fallthru
        _
      %p174 = scmp.le.s32.totalorder 1, %s16
      %p175 = scmp.lt.s32.totalorder %s16, 3
      %p176 = pnand %p174, %p175
      %p177 = pneg %p176
      // Predicated region
      $region29: #{tpu_custom_call.1} parent=5 // pred_check
        _
      $region30: #{tpu_custom_call.1} parent=5 // pred_check_branch
        %179 = sbr.rel (%p176) target = $region32
      $region31: #{tpu_custom_call.1} parent=5 // pred_region
        %s180 = ssub.s32 %s16, 1
        %s181 = sand.u32 %s29, 1
        %s182 = scalar_lea.sflag [#allocation3], %s181
        %s183 = sand.u32 %s29, 1
        %s184 = smul.addr %s183, 16
        %s185 = scalar_lea.vmem [#allocation2], %s184
        // Predicated region
        $region33: #{tpu_custom_call.1} parent=31 // pred_check
          %p186 = pneg %p42
        $region34: #{tpu_custom_call.1} parent=31 // pred_check_branch
          %188 = sbr.rel (%p186) target = $region36
        $region35: #{tpu_custom_call.1} parent=31 // pred_region
          %189 = dma.done %s182, 256
        $region36: #{tpu_custom_call.1} parent=31 // pred_fallthru
          _
        // Predicated region
        $region37: #{tpu_custom_call.1} parent=31 // pred_check
          %p190 = pneg %p63
        $region38: #{tpu_custom_call.1} parent=31 // pred_check_branch
          %192 = sbr.rel (%p190) target = $region40
        $region39: #{tpu_custom_call.1} parent=31 // pred_region
          %193 = dma.done [#allocation6], 4096
        $region40: #{tpu_custom_call.1} parent=31 // pred_fallthru
          _
        // Predicated region
        $region41: #{tpu_custom_call.1} parent=31 // pred_check
          %p194 = pneg %p84
        $region42: #{tpu_custom_call.1} parent=31 // pred_check_branch
          %196 = sbr.rel (%p194) target = $region44
        $region43: #{tpu_custom_call.1} parent=31 // pred_region
          %197 = dma.done [#allocation6], 128
        $region44: #{tpu_custom_call.1} parent=31 // pred_fallthru
          _
        %s198 = sand.u32 %s29, 1
        %s199 = scalar_lea.sflag [#allocation3], %s198
        %s200 = sand.u32 %s29, 1
        %s201 = smul.addr %s200, 16
        %s202 = scalar_lea.vmem [#allocation2], %s201
        %p203 = pneg %p42
        %p204 = pneg %p39
        %p205 = pneg %p63
        %p206 = pneg %p60
        %p207 = pneg %p84
        %p208 = pneg %p81
        %p209 = pneg %p110
        %p210 = pneg %p107
        %s211 = sand.u32 %s97, 1
        %s212 = scalar_lea.sflag [#allocation4], %s211
        %s213 = sand.u32 %s97, 1
        %s214 = smul.addr %s213, 32
        %s215 = scalar_lea.vmem [#allocation8], %s214
        %s216 = smul.u32 2, %s21
        %s217 = smul.u32 2, %s21
        %v218 = vld [vmem:[%s185] sm:$0xff]
        %v219 = vld [vmem:[%s185 + $0x8] sm:$0xff]
        %v220 = vld [vmem:[#allocation5] sm:$0xff]
        %v221 = vld [vmem:[#allocation5 + $0x8] sm:$0xff]
        %v222 = vld [vmem:[#allocation5 + $0x10] sm:$0xff]
        %v223 = vld [vmem:[#allocation5 + $0x18] sm:$0xff]
        %v224 = vld [vmem:[#allocation5 + $0x20] sm:$0xff]
        %v225 = vld [vmem:[#allocation5 + $0x28] sm:$0xff]
        %v226 = vld [vmem:[#allocation5 + $0x30] sm:$0xff]
        %v227 = vld [vmem:[#allocation5 + $0x38] sm:$0xff]
        %v228 = vld [vmem:[#allocation5 + $0x40] sm:$0xff]
        %v229 = vld [vmem:[#allocation5 + $0x48] sm:$0xff]
        %v230 = vld [vmem:[#allocation5 + $0x50] sm:$0xff]
        %v231 = vld [vmem:[#allocation5 + $0x58] sm:$0xff]
        %v232 = vld [vmem:[#allocation5 + $0x60] sm:$0xff]
        %v233 = vld [vmem:[#allocation5 + $0x68] sm:$0xff]
        %v234 = vld [vmem:[#allocation5 + $0x70] sm:$0xff]
        %v235 = vld [vmem:[#allocation5 + $0x78] sm:$0xff]
        %v236 = vld [vmem:[#allocation5 + $0x80] sm:$0xff]
        %v237 = vld [vmem:[#allocation5 + $0x88] sm:$0xff]
        %v238 = vld [vmem:[#allocation5 + $0x90] sm:$0xff]
        %v239 = vld [vmem:[#allocation5 + $0x98] sm:$0xff]
        %v240 = vld [vmem:[#allocation5 + $0xa0] sm:$0xff]
        %v241 = vld [vmem:[#allocation5 + $0xa8] sm:$0xff]
        %v242 = vld [vmem:[#allocation5 + $0xb0] sm:$0xff]
        %v243 = vld [vmem:[#allocation5 + $0xb8] sm:$0xff]
        %v244 = vld [vmem:[#allocation5 + $0xc0] sm:$0xff]
        %v245 = vld [vmem:[#allocation5 + $0xc8] sm:$0xff]
        %v246 = vld [vmem:[#allocation5 + $0xd0] sm:$0xff]
        %v247 = vld [vmem:[#allocation5 + $0xd8] sm:$0xff]
        %v248 = vld [vmem:[#allocation5 + $0xe0] sm:$0xff]
        %v249 = vld [vmem:[#allocation5 + $0xe8] sm:$0xff]
        %v250 = vld [vmem:[#allocation5 + $0xf0] sm:$0xff]
        %v251 = vld [vmem:[#allocation5 + $0xf8] sm:$0xff]
        %v252 = vld [vmem:[#allocation7] ss:$4 sm:$0x3]
        %v254 = vlaneseq
        %v255 = vshrl.u32 %v254, 7
        %v256 = vsub.s32 0, %v255
        %v257 = vrot.slane %v252, %v256
        %v258 = vlaneseq
        %v259 = vshrl.u32 %v258, 7
        %v260 = vsub.s32 1, %v259
        %v261 = vrot.slane %v252, %v260
        %264 = vmatprep.subr.mxu0 %v251
        %265 = vmatpush1.msra.mxu0 %v250
        %266 = vmatprep.subr.mxu0 %v249
        %267 = vmatpush1.msra.mxu0 %v248
        %268 = vmatprep.subr.mxu0 %v247
        %269 = vmatpush1.msra.mxu0 %v246
        %270 = vmatprep.subr.mxu0 %v245
        %271 = vmatpush1.msra.mxu0 %v244
        %272 = vmatprep.subr.mxu0 %v243
        %273 = vmatpush1.msra.mxu0 %v242
        %274 = vmatprep.subr.mxu0 %v241
        %275 = vmatpush1.msra.mxu0 %v240
        %276 = vmatprep.subr.mxu0 %v239
        %277 = vmatpush1.msra.mxu0 %v238
        %278 = vmatprep.subr.mxu0 %v237
        %279 = vmatpush1.msra.mxu0 %v236
        %280 = vmatprep.subr.mxu0 %v235
        %281 = vmatpush1.msra.mxu0 %v234
        %282 = vmatprep.subr.mxu0 %v233
        %283 = vmatpush1.msra.mxu0 %v232
        %284 = vmatprep.subr.mxu0 %v231
        %285 = vmatpush1.msra.mxu0 %v230
        %286 = vmatprep.subr.mxu0 %v229
        %287 = vmatpush1.msra.mxu0 %v228
        %288 = vmatprep.subr.mxu0 %v227
        %289 = vmatpush1.msra.mxu0 %v226
        %290 = vmatprep.subr.mxu0 %v225
        %291 = vmatpush1.msra.mxu0 %v224
        %292 = vmatprep.subr.mxu0 %v223
        %293 = vmatpush1.msra.mxu0 %v222
        %294 = vmatprep.subr.mxu0 %v221
        %295 = vmatpush1.msra.mxu0 %v220
        %296 = vmatprep.subr.mxu0 0.0
        %297 = vmatpush2.msra.mxu0 0.0
        %298 = vmatprep.subr.mxu0 0.0
        %299 = vmatpush2.msra.mxu0 0.0
        %300 = vmatprep.subr.mxu0 0.0
        %301 = vmatpush2.msra.mxu0 0.0
        %302 = vmatprep.subr.mxu0 0.0
        %303 = vmatpush2.msra.mxu0 0.0
        %304 = vmatprep.subr.mxu0 0.0
        %305 = vmatpush2.msra.mxu0 0.0
        %306 = vmatprep.subr.mxu0 0.0
        %307 = vmatpush2.msra.mxu0 0.0
        %308 = vmatprep.subr.mxu0 0.0
        %309 = vmatpush2.msra.mxu0 0.0
        %310 = vmatprep.subr.mxu0 0.0
        %311 = vmatpush2.msra.mxu0 0.0
        %312 = vmatprep.subr.mxu0 0.0
        %313 = vmatpush2.msra.mxu0 0.0
        %314 = vmatprep.subr.mxu0 0.0
        %315 = vmatpush2.msra.mxu0 0.0
        %316 = vmatprep.subr.mxu0 0.0
        %317 = vmatpush2.msra.mxu0 0.0
        %318 = vmatprep.subr.mxu0 0.0
        %319 = vmatpush2.msra.mxu0 0.0
        %320 = vmatprep.subr.mxu0 0.0
        %321 = vmatpush2.msra.mxu0 0.0
        %322 = vmatprep.subr.mxu0 0.0
        %323 = vmatpush2.msra.mxu0 0.0
        %324 = vmatprep.subr.mxu0 0.0
        %325 = vmatpush2.msra.mxu0 0.0
        %326 = vmatprep.subr.mxu0 0.0
        %327 = vmatpush2.msra.mxu0 0.0
        %328 = vmatprep.mubr.f32.mxu0 0.0
        %329 = vmatmul.mubr.f32.gmra.mxu0 %v218
        %v330 = vpop.f32.mrf.mxu0
        %v331 = vadd.f32 %v257, %v330
        %v332 = vpop.f32.mrf.mxu0
        %v333 = vadd.f32 %v261, %v332
        %334 = vmatprep.mubr.f32.mxu0 0.0
        %335 = vmatmul.mubr.f32.gmra.mxu0 %v219
        %v336 = vpop.f32.mrf.mxu0
        %v337 = vadd.f32 %v257, %v336
        %v338 = vpop.f32.mrf.mxu0
        %v339 = vadd.f32 %v261, %v338
        %340 = vdwg.mxu0
        %v341 = vmax.f32 %v331, 0.0
        %v342 = vmax.f32 %v333, 0.0
        %v343 = vmax.f32 %v337, 0.0
        %v344 = vmax.f32 %v339, 0.0
        %s345 = scalar_lea.vmem [#allocation7], 1
        %v346 = vld [vmem:[%s345] ss:$4 sm:$0x3]
        %v348 = vlaneseq
        %v349 = vshrl.u32 %v348, 7
        %v350 = vsub.s32 0, %v349
        %v351 = vrot.slane %v346, %v350
        %v352 = vlaneseq
        %v353 = vshrl.u32 %v352, 7
        %v354 = vsub.s32 1, %v353
        %v355 = vrot.slane %v346, %v354
        %v358 = vmul.f32 %v341, %v351
        %v359 = vmul.f32 %v342, %v355
        %v360 = vmul.f32 %v343, %v351
        %v361 = vmul.f32 %v344, %v355
        %s362 = scalar_lea.vmem [#allocation7], 2
        %v363 = vld [vmem:[%s362] ss:$4 sm:$0x3]
        %v365 = vlaneseq
        %v366 = vshrl.u32 %v365, 7
        %v367 = vsub.s32 0, %v366
        %v368 = vrot.slane %v363, %v367
        %v369 = vlaneseq
        %v370 = vshrl.u32 %v369, 7
        %v371 = vsub.s32 1, %v370
        %v372 = vrot.slane %v363, %v371
        %v375 = vadd.f32 %v358, %v368
        %v376 = vadd.f32 %v359, %v372
        %v377 = vadd.f32 %v360, %v368
        %v378 = vadd.f32 %v361, %v372
        %379 = vst [vmem:[%s215] sm:$0xff] %v375
        %380 = vst [vmem:[%s215 + $0x8] sm:$0xff] %v376
        %381 = vst [vmem:[%s215 + $0x10] sm:$0xff] %v377
        %382 = vst [vmem:[%s215 + $0x18] sm:$0xff] %v378
        %s383 = sand.u32 %s97, 1
        %s384 = scalar_lea.sflag [#allocation4], %s383
        %s385 = sand.u32 %s97, 1
        %s386 = smul.addr %s385, 32
        %s387 = scalar_lea.vmem [#allocation8], %s386
        // Predicated region
        $region45: #{tpu_custom_call.1} parent=31 // pred_check
          %p388 = pneg %p107
        $region46: #{tpu_custom_call.1} parent=31 // pred_check_branch
          %390 = sbr.rel (%p388) target = $region48
        $region47: #{tpu_custom_call.1} parent=31 // pred_region
          %s391 = smul.u32 2, %s21
          %s393 = ssub.s32 512, 512
          %394 = vsyncadd %s384, %s393
          %s395 = smul.addr %s391, 2
          %s396 = smul.addr %s395, 128
          %s397 = scalar_lea.hbm %s3, %s396
          %s398 = sshll.u32 %s387, 4
          %s399 = int_to_ptr.vmem [resolvable:$true] %s398
          %404 = dma.vmem_to_hbm [thread:$0]  %s399, 512, %s397, %s384, 256, 256, 16
        $region48: #{tpu_custom_call.1} parent=31 // pred_fallthru
          _
      $region32: #{tpu_custom_call.1} parent=5 // pred_fallthru
        _
      %p405 = scmp.le.s32.totalorder 2, %s16
      // Predicated region
      $region49: #{tpu_custom_call.1} parent=5 // pred_check
        %p406 = pneg %p405
      $region50: #{tpu_custom_call.1} parent=5 // pred_check_branch
        %408 = sbr.rel (%p406) target = $region52
      $region51: #{tpu_custom_call.1} parent=5 // pred_region
        %s409 = ssub.s32 %s16, 2
        // Predicated region
        $region53: #{tpu_custom_call.1} parent=51 // pred_check
          %p410 = pneg %p113
        $region54: #{tpu_custom_call.1} parent=51 // pred_check_branch
          %412 = sbr.rel (%p410) target = $region56
        $region55: #{tpu_custom_call.1} parent=51 // pred_region
          %s413 = sand.u32 %s98, 1
          %s414 = scalar_lea.sflag [#allocation4], %s413
          %s415 = sand.u32 %s98, 1
          %s416 = smul.addr %s415, 32
          %s417 = scalar_lea.vmem [#allocation8], %s416
          %418 = dma.done %s414, 512
        $region56: #{tpu_custom_call.1} parent=51 // pred_fallthru
          _
      $region52: #{tpu_custom_call.1} parent=5 // pred_fallthru
        _
    $region6: #{tpu_custom_call.1} parent=1 // loop_footer
      %s20 = sadd.s32 1, %s16
    $region7: #{tpu_custom_call.1} parent=1 // loop_footer_branch
      %15 = sbr.rel target = $region3
    $region8: #{tpu_custom_call.1} parent=1 // loop_exit
      _
    %419 = vsyncpa [#allocation3], 1
    %s420 = scalar_lea.sflag [#allocation3], 1
    %421 = vsyncpa %s420, 1
    %422 = vsyncpa [#allocation6], 1
    %423 = vsyncpa [#allocation4], 1
    %s424 = scalar_lea.sflag [#allocation4], 1
    %425 = vsyncpa %s424, 1

</llo_original>
